<compile_context>
chip_gen: v6e
topology: v6e:2x2x1
jax: 0.10.0
libtpu: 0.0.40
codegen_flags: <defaults>
</compile_context>

<pallas_src>
import jax
import jax.numpy as jnp
from jax.experimental import pallas as pl
from jax.experimental.pallas import tpu as pltpu


def _round_up(x, m):
    return (x + m - 1) // m * m


# ----------------------------- backbone kernel ------------------------------
def backbone_kernel(x_ref, w_ref, b_ref, o_ref, acc_ref):
    # x_ref: (tm, tk) bf16   w_ref: (tk, d_pad) bf16
    # b_ref: (1, d_pad) f32  o_ref: (tm, d_pad) f32  acc_ref: (tm, d_pad) f32
    k = pl.program_id(1)

    @pl.when(k == 0)
    def _():
        acc_ref[...] = jnp.zeros_like(acc_ref)

    acc_ref[...] += jnp.dot(x_ref[...], w_ref[...],
                            preferred_element_type=jnp.float32)

    @pl.when(k == pl.num_programs(1) - 1)
    def _():
        h = acc_ref[...] + b_ref[...]
        o_ref[...] = jnp.maximum(h, 0.0).astype(o_ref.dtype)


def backbone_forward(x_bf16, w_bf16, b_f32):
    """x_bf16: (N, K) bf16, w_bf16: (K, d_pad) bf16, b_f32: (1, d_pad) f32."""
    N, K = x_bf16.shape
    d_pad = w_bf16.shape[1]

    # Tile sizes: sublane/lane aligned, capped so double-buffered working set
    # stays far below the 32 MiB scoped VMEM (safe on v5e/v6e/v7x).
    tm = min(256, _round_up(N, 16))
    tk = min(512, _round_up(K, 128))
    N_pad = _round_up(N, tm)
    K_pad = _round_up(K, tk)

    if N_pad != N or K_pad != K:
        x_bf16 = jnp.pad(x_bf16, ((0, N_pad - N), (0, K_pad - K)))
    if K_pad != K:
        w_bf16 = jnp.pad(w_bf16, ((0, K_pad - K), (0, 0)))

    out = pl.pallas_call(
        backbone_kernel,
        out_shape=jax.ShapeDtypeStruct((N_pad, d_pad), jnp.float32),
        grid=(N_pad // tm, K_pad // tk),
        in_specs=[
            pl.BlockSpec((tm, tk), lambda i, k: (i, k)),
            pl.BlockSpec((tk, d_pad), lambda i, k: (k, 0)),
            pl.BlockSpec((1, d_pad), lambda i, k: (0, 0)),
        ],
        out_specs=pl.BlockSpec((tm, d_pad), lambda i, k: (i, 0)),
        scratch_shapes=[pltpu.VMEM((tm, d_pad), jnp.float32)],
        compiler_params=pltpu.CompilerParams(
            dimension_semantics=("parallel", "arbitrary"),
            vmem_limit_bytes=32 * 1024 * 1024),
    )(x_bf16, w_bf16, b_f32)
    return out[:N]


# ------------------------------- head kernel --------------------------------
def head_kernel(y_ref, supp_f_ref, qry_f_ref, sb_ref, out_ref):
    # y_ref:      (B, nSupp)        int32 (VMEM)
    # supp_f_ref: (B, nSupp, d_pad) f32
    # qry_f_ref:  (B, nQry, d_pad)  f32
    # sb_ref:     (2,)              f32 SMEM: [scale, scale*bias]
    # out_ref:    (B, nQry, nC_pad) f32
    B, nQry, nC_pad = out_ref.shape
    nSupp = supp_f_ref.shape[1]

    y = y_ref[...].reshape(B, 1, nSupp)                                  # (B,1,S)
    cls = jax.lax.broadcasted_iota(jnp.int32, (B, nC_pad, nSupp), 1)
    onehot = (cls == y).astype(jnp.float32)                              # (B,C,S)

    supp_f = supp_f_ref[...]
    qry_f = qry_f_ref[...]

    # Unnormalized prototypes; the reference's "/ count" cancels under the
    # subsequent L2 normalization (and its 0/0 NaN path is avoided).
    proto = jnp.einsum("bcs,bsd->bcd", onehot, supp_f,
                       preferred_element_type=jnp.float32)               # (B,C,d)

    # Raw cosine numerators on the MXU.
    raw = jnp.einsum("bqd,bcd->bqc", qry_f, proto,
                     preferred_element_type=jnp.float32)                 # (B,Q,C)

    # Inverse L2 norms via rsqrt (EUP); scale the small (Q, C) result instead
    # of normalizing the full (Q,d)/(C,d) tensors.
    q_inv = jax.lax.rsqrt(jnp.maximum(
        jnp.sum(qry_f * qry_f, axis=-1, keepdims=True), 1e-24))          # (B,Q,1)
    p_inv = jax.lax.rsqrt(jnp.maximum(
        jnp.sum(proto * proto, axis=-1), 1e-24))[:, None, :]             # (B,1,C)

    scale = sb_ref[0]
    sbias = sb_ref[1]   # = scale * bias (folded in the wrapper)
    out_ref[...] = ((raw * q_inv * p_inv) * scale + sbias).astype(out_ref.dtype)


def protonet_head(supp_y, supp_f, qry_f, scale_bias, nC_pad):
    B, nSupp, d_pad = supp_f.shape
    nQry = qry_f.shape[1]
    supp_y = supp_y.astype(jnp.int32)
    return pl.pallas_call(
        head_kernel,
        out_shape=jax.ShapeDtypeStruct((B, nQry, nC_pad), jnp.float32),
        grid=(1,),
        in_specs=[
            pl.BlockSpec((B, nSupp), lambda i: (0, 0)),
            pl.BlockSpec((B, nSupp, d_pad), lambda i: (0, 0, 0)),
            pl.BlockSpec((B, nQry, d_pad), lambda i: (0, 0, 0)),
            pl.BlockSpec(memory_space=pltpu.MemorySpace.SMEM),
        ],
        out_specs=pl.BlockSpec((B, nQry, nC_pad), lambda i: (0, 0, 0)),
        compiler_params=pltpu.CompilerParams(
            dimension_semantics=("arbitrary",)),
    )(supp_y, supp_f, qry_f, scale_bias)


# ------------------------------ full forward --------------------------------
def protonet_forward(params, supp_x, supp_y, x, num_classes):
    B, nSupp, C, H, W = supp_x.shape
    nQry = x.shape[1]
    K = C * H * W
    d = params["w_bb"].shape[1]

    # Pad feature dim to a lane-dense multiple of 128 (zero weight/bias columns
    # produce zero features, so downstream dots/norms are unchanged).
    d_pad = _round_up(d, 128)
    w_pad = jnp.pad(params["w_bb"], ((0, 0), (0, d_pad - d))).astype(jnp.bfloat16)
    b_pad = jnp.pad(params["b_bb"], ((0, 0), (0, d_pad - d))).astype(jnp.float32)

    # Fuse support + query through ONE backbone call (weight DMA'd once).
    feats_in = jnp.concatenate(
        [supp_x.reshape(B * nSupp, K), x.reshape(B * nQry, K)],
        axis=0).astype(jnp.bfloat16)
    feats = backbone_forward(feats_in, w_pad, b_pad)          # (N_total, d_pad)

    supp_f = feats[:B * nSupp].reshape(B, nSupp, d_pad)
    qry_f = feats[B * nSupp:B * (nSupp + nQry)].reshape(B, nQry, d_pad)

    # Pad class dim to lane width; fold scale*(s + bias) = scale*s + scale*bias.
    nC_pad = _round_up(num_classes, 128)
    scale = params["scale_cls"][0]
    scale_bias = jnp.stack([scale, scale * params["bias"][0]]).astype(jnp.float32)

    logits_pad = protonet_head(supp_y, supp_f, qry_f, scale_bias, nC_pad)
    return logits_pad[:, :, :num_classes]


# --------------------------- pure-JAX reference -----------------------------
def protonet_reference(params, supp_x, supp_y, x, num_classes):
    B, nSupp, C, H, W = supp_x.shape
    nQry = x.shape[1]
    K = C * H * W

    w = params["w_bb"].astype(jnp.bfloat16)
    b = params["b_bb"].astype(jnp.float32)

    def bb(xf):
        h = jnp.dot(xf.astype(jnp.bfloat16), w,
                    preferred_element_type=jnp.float32)
        return jnp.maximum(h + b, 0.0)

    supp_f = bb(supp_x.reshape(B * nSupp, K)).reshape(B, nSupp, -1)
    qry_f = bb(x.reshape(B * nQry, K)).reshape(B, nQry, -1)

    onehot = jax.nn.one_hot(supp_y, num_classes, dtype=jnp.float32)  # (B,S,C)
    onehot = jnp.swapaxes(onehot, 1, 2)                              # (B,C,S)
    proto = jnp.einsum("bcs,bsd->bcd", onehot, supp_f)
    proto = proto / jnp.sum(onehot, axis=2, keepdims=True)

    def l2n(v):
        return v / jnp.maximum(
            jnp.sqrt(jnp.sum(v * v, axis=-1, keepdims=True)), 1e-12)

    scores = jnp.einsum("bqd,bcd->bqc", l2n(qry_f), l2n(proto))
    return params["scale_cls"][0] * (scores + params["bias"][0])


# ------------------------------------ main -----------------------------------
if __name__ == "__main__":
    B, nSupp, nQry = 2, 8, 4
    C, H, W = 4, 16, 16
    num_classes = 4
    d = 32
    K = C * H * W

    key = jax.random.PRNGKey(0)
    k1, k2, k3 = jax.random.split(key, 3)

    supp_x = jax.random.normal(k1, (B, nSupp, C, H, W), dtype=jnp.float32)
    x = jax.random.normal(k2, (B, nQry, C, H, W), dtype=jnp.float32)
    # each class appears nSupp // num_classes times per episode
    supp_y = jnp.tile(jnp.arange(num_classes, dtype=jnp.int32),
                      (B, nSupp // num_classes))

    params = {
        "w_bb": 0.02 * jax.random.normal(k3, (K, d), dtype=jnp.float32),
        "b_bb": jnp.zeros((1, d), dtype=jnp.float32),
        "scale_cls": jnp.full((1,), 10.0, dtype=jnp.float32),  # torch init: 10
        "bias": jnp.zeros((1,), dtype=jnp.float32),            # torch init: 0
    }

    logits = protonet_forward(params, supp_x, supp_y, x, num_classes)
    logits = jax.block_until_ready(logits)

    ref = protonet_reference(params, supp_x, supp_y, x, num_classes)
    assert logits.shape == (B, nQry, num_classes)
    assert jnp.allclose(logits, ref, atol=1e-3, rtol=1e-3), "mismatch vs reference"

    print("KERNEL_OK")
</pallas_src>

<mosaic_0001>
module attributes {stable_mosaic.version = 11 : i64} {
  func.func @backbone_kernel(%arg0: i32, %arg1: i32, %arg2: memref<32x512xbf16, #tpu.memory_space<vmem>>, %arg3: memref<512x128xbf16, #tpu.memory_space<vmem>>, %arg4: memref<1x128xf32, #tpu.memory_space<vmem>>, %arg5: memref<32x128xf32, #tpu.memory_space<vmem>>, %arg6: memref<32x128xf32, #tpu.memory_space<vmem>>) attributes {dimension_semantics = [#tpu.dimension_semantics<parallel>, #tpu.dimension_semantics<arbitrary>], iteration_bounds = array<i64: 1, 2>, scalar_prefetch = 0 : i64, scratch_operands = 1 : i64, tpu.core_type = #tpu.core_type<tc>, window_params = [{transform_indices = @transform_0, window_bounds = array<i64: 32, 512>}, {transform_indices = @transform_1, window_bounds = array<i64: 512, 128>}, {pipeline_mode = #tpu.pipeline_mode<synchronous>, transform_indices = @transform_2, window_bounds = array<i64: 1, 128>}, {transform_indices = @transform_3, window_bounds = array<i64: 32, 128>}]} {
    %c0_i32 = arith.constant 0 : i32
    %0 = arith.cmpi eq, %arg1, %c0_i32 : i32
    %1 = arith.extui %0 : i1 to i32
    %c0_i32_0 = arith.constant 0 : i32
    %2 = arith.cmpi ne, %1, %c0_i32_0 : i32
    scf.if %2 {
      %cst_9 = arith.constant 0.000000e+00 : f32
      %12 = vector.broadcast %cst_9 : f32 to vector<32x128xf32>
      %c0_10 = arith.constant 0 : index
      %c0_11 = arith.constant 0 : index
      %13 = vector.load %arg6[%c0_10, %c0_11] : memref<32x128xf32, #tpu.memory_space<vmem>>, vector<32x128xf32>
      tpu.vector_store %arg6[%c0_10, %c0_11], %12 {strides = array<i32>} : memref<32x128xf32, #tpu.memory_space<vmem>>, vector<32x128xf32>,
    } else {
    }
    %c0 = arith.constant 0 : index
    %c0_1 = arith.constant 0 : index
    %3 = vector.load %arg6[%c0, %c0_1] : memref<32x128xf32, #tpu.memory_space<vmem>>, vector<32x128xf32>
    %c0_2 = arith.constant 0 : index
    %c0_3 = arith.constant 0 : index
    %4 = vector.load %arg2[%c0_2, %c0_3] : memref<32x512xbf16, #tpu.memory_space<vmem>>, vector<32x512xbf16>
    %c0_4 = arith.constant 0 : index
    %c0_5 = arith.constant 0 : index
    %5 = vector.load %arg3[%c0_4, %c0_5] : memref<512x128xbf16, #tpu.memory_space<vmem>>, vector<512x128xbf16>
    %cst = arith.constant dense<0.000000e+00> : vector<32x128xf32>
    %6 = tpu.matmul %4, %5, %cst {dimension_numbers = #tpu.dot_dimension_numbers<[1], [0], [0], [1], [0, 0, 1, 1], [], []>} : vector<32x512xbf16>, vector<512x128xbf16>, vector<32x128xf32> -> vector<32x128xf32>
    %7 = arith.addf %3, %6 : vector<32x128xf32>
    %c0_6 = arith.constant 0 : index
    %c0_7 = arith.constant 0 : index
    %8 = vector.load %arg6[%c0_6, %c0_7] : memref<32x128xf32, #tpu.memory_space<vmem>>, vector<32x128xf32>
    tpu.vector_store %arg6[%c0_6, %c0_7], %7 {strides = array<i32>} : memref<32x128xf32, #tpu.memory_space<vmem>>, vector<32x128xf32>,
    %c1_i32 = arith.constant 1 : i32
    %9 = arith.cmpi eq, %arg1, %c1_i32 : i32
    %10 = arith.extui %9 : i1 to i32
    %c0_i32_8 = arith.constant 0 : i32
    %11 = arith.cmpi ne, %10, %c0_i32_8 : i32
    scf.if %11 {
      %c0_9 = arith.constant 0 : index
      %c0_10 = arith.constant 0 : index
      %12 = vector.load %arg6[%c0_9, %c0_10] : memref<32x128xf32, #tpu.memory_space<vmem>>, vector<32x128xf32>
      %c0_11 = arith.constant 0 : index
      %c0_12 = arith.constant 0 : index
      %13 = vector.load %arg4[%c0_11, %c0_12] : memref<1x128xf32, #tpu.memory_space<vmem>>, vector<1x128xf32>
      %14 = vector.broadcast %13 : vector<1x128xf32> to vector<32x128xf32>
      %15 = arith.addf %12, %14 : vector<32x128xf32>
      %cst_13 = arith.constant 0.000000e+00 : f32
      %16 = vector.broadcast %cst_13 : f32 to vector<32x128xf32>
      %17 = arith.maximumf %15, %16 : vector<32x128xf32>
      %c0_14 = arith.constant 0 : index
      %c0_15 = arith.constant 0 : index
      %18 = vector.load %arg5[%c0_14, %c0_15] : memref<32x128xf32, #tpu.memory_space<vmem>>, vector<32x128xf32>
      tpu.vector_store %arg5[%c0_14, %c0_15], %17 {strides = array<i32>} : memref<32x128xf32, #tpu.memory_space<vmem>>, vector<32x128xf32>,
    } else {
    }
    return
  }
  func.func @transform_0(%arg0: i32, %arg1: i32) -> (i32, i32) {
    %c0_i32 = arith.constant 0 : i32
    return %arg0, %arg1 : i32, i32
  }
  func.func @transform_1(%arg0: i32, %arg1: i32) -> (i32, i32) {
    %c0_i32 = arith.constant 0 : i32
    %c0_i32_0 = arith.constant 0 : i32
    return %arg1, %c0_i32 : i32, i32
  }
  func.func @transform_2(%arg0: i32, %arg1: i32) -> (i32, i32) {
    %c0_i32 = arith.constant 0 : i32
    %c0_i32_0 = arith.constant 0 : i32
    %c0_i32_1 = arith.constant 0 : i32
    return %c0_i32, %c0_i32_0 : i32, i32
  }
  func.func @transform_3(%arg0: i32, %arg1: i32) -> (i32, i32) {
    %c0_i32 = arith.constant 0 : i32
    %c0_i32_0 = arith.constant 0 : i32
    return %arg0, %c0_i32 : i32, i32
  }
}

</mosaic_0001>

<llo_original>
// kernel: tpu_custom_call.1
$region0: #{tpu_custom_call.1}
  #allocation0 [shape = 'u32[]', space=smem, size = 0x4, offset = 0x4, fixed_abs, tag = 'smem constant byte address 0x4 - core index']
  #allocation1 [shape = 'u32[144,128]{1,0:T(1,128)}', space=vmem, size = 0x12000, scoped, tag = 'internal scratch']
  #allocation2 [shape = 'f32[32,128]{1,0:T(8,128)}', space=vmem, size = 0x4000, scoped, tag = 'scratch operand']
  %s0 = inlined_call_operand.hbm [shape: bf16[32,1024], index: 0, kind: input, shape index: {}]
  %s1 = inlined_call_operand.hbm [shape: bf16[1024,128], index: 1, kind: input, shape index: {}]
  %s2 = inlined_call_operand.vmem [shape: f32[1,128], index: 2, kind: input, shape index: {}]
  %s3 = inlined_call_operand.hbm [shape: f32[32,128], index: 3, kind: output, shape index: {}]
  %s4 = sld [smem:[#allocation0]]
  $region61: #{tpu_custom_call.1} parent=0
    _
  %s6 = ssub.s32 1, %s4
  %s7 = scalar_select 0, %s6, %s4
  $region1: #{tpu_custom_call.1} parent=0
    #allocation3 [shape = 'u8[65536]{0}', space=vmem, size = 0x10000, scoped, tag = 'input window, operand 0']
    #allocation4 [shape = 's32[2]{0}', space=sflag, size = 0x8, scoped, tag = 'scoped memory for tpu_custom_call.1']
    #allocation5 [shape = 's32[2]{0}', space=sflag, size = 0x8, scoped, tag = 'scoped memory for tpu_custom_call.1']
    #allocation6 [shape = 'u8[262144]{0}', space=vmem, size = 0x40000, scoped, tag = 'input window, operand 1']
    #allocation7 [shape = 's32[2]{0}', space=sflag, size = 0x8, scoped, tag = 'scoped memory for tpu_custom_call.1']
    #allocation8 [shape = 'u8[16384]{0}', space=vmem, size = 0x4000, scoped, tag = 'output window, operand 0, single buffered']
    %8 = vsyncpa [#allocation4], 0
    %s9 = scalar_lea.sflag [#allocation4], 1
    %10 = vsyncpa %s9, 0
    %11 = vsyncpa [#allocation7], 0
    %s12 = scalar_lea.sflag [#allocation7], 1
    %13 = vsyncpa %s12, 0
    %14 = vsyncpa [#allocation5], 0
    loop: start=0, step=1, limit=4
    $region2: #{tpu_custom_call.1} parent=1 // loop_pre_header
      _
    $region3: #{tpu_custom_call.1} parent=1 // loop_header
      %s16 = sphi 0, %s20
      %p17 = scmp.ge.s32.totalorder %s16, 4
      %s23 = sphi 0, %s35
      %s24 = sphi 0, %s31
      %s25 = sphi 0, %s23
      %s26 = sphi 0, %s24
      %s27 = sphi 0, %s25
      %s28 = sphi 0, %s26
      %s40 = sphi 0, %s42
      %s43 = sphi 0, %s40
      %s44 = sphi 0, %s43
      %s60 = sphi 0, %s44
      %s66 = sphi 0, %s68
      %s69 = sphi 0, %s66
      %s70 = sphi 0, %s69
      %s86 = sphi 0, %s70
      %s90 = sphi 0, %s90
      %s92 = sphi 0, %s90
      %s93 = sphi 0, %s92
      %s107 = sphi 0, %s93
      %s113 = sphi 0, %s115
      %s116 = sphi 0, %s113
      %s117 = sphi 0, %s116
      %s133 = sphi 0, %s117
    $region4: #{tpu_custom_call.1} parent=1 // loop_header_branch
      %19 = sbr.rel (%p17) target = $region8
    $region5: #{tpu_custom_call.1} parent=1 // loop_body
      %s21 = ssub.s32 %s16, 1
      %s22 = ssub.s32 %s16, 2
      %s29 = sadd.s32 1, %s24
      %p30 = scmp.ge.s32.totalorder %s29, 2
      %s31 = scalar_select %p30, 0, %s29
      %s32 = sadd.s32 1, %s23
      %s33 = scalar_select %p30, %s32, %s23
      %p34 = scmp.ge.s32.totalorder %s33, 1
      %s35 = scalar_select %p34, 0, %s33
      %s36 = ssub.s32 %s23, %s35
      %s37 = ssub.s32 %s24, %s31
      %s38 = sor.u32 %s36, %s37
      %p39 = scmp.eq.s32.totalorder %s38, 0
      %s41 = sadd.s32 %s40, 1
      %s42 = scalar_select %p39, %s40, %s41
      %p45 = pneg %p39
      %p46 = scmp.eq.s32.totalorder %s16, 1
      %p47 = por %p45, %p46
      %p48 = scmp.ne.s32.totalorder %s40, %s43
      %p49 = scmp.eq.s32.totalorder %s16, 0
      %p50 = por %p48, %p49
      %p51 = scmp.ne.s32.totalorder %s40, %s43
      %p52 = scmp.eq.s32.totalorder %s21, 1
      %p53 = por %p51, %p52
      %p54 = scmp.ne.s32.totalorder %s43, %s44
      %p55 = scmp.eq.s32.totalorder %s21, 0
      %p56 = por %p54, %p55
      %p57 = scmp.ne.s32.totalorder %s43, %s44
      %p58 = scmp.eq.s32.totalorder %s22, 1
      %p59 = por %p57, %p58
      %p61 = scmp.ne.s32.totalorder %s44, %s60
      %p62 = scmp.eq.s32.totalorder %s22, 0
      %p63 = por %p61, %p62
      %s64 = ssub.s32 %s24, %s31
      %p65 = scmp.eq.s32.totalorder %s64, 0
      %s67 = sadd.s32 %s66, 1
      %s68 = scalar_select %p65, %s66, %s67
      %p71 = pneg %p65
      %p72 = scmp.eq.s32.totalorder %s16, 1
      %p73 = por %p71, %p72
      %p74 = scmp.ne.s32.totalorder %s66, %s69
      %p75 = scmp.eq.s32.totalorder %s16, 0
      %p76 = por %p74, %p75
      %p77 = scmp.ne.s32.totalorder %s66, %s69
      %p78 = scmp.eq.s32.totalorder %s21, 1
      %p79 = por %p77, %p78
      %p80 = scmp.ne.s32.totalorder %s69, %s70
      %p81 = scmp.eq.s32.totalorder %s21, 0
      %p82 = por %p80, %p81
      %p83 = scmp.ne.s32.totalorder %s69, %s70
      %p84 = scmp.eq.s32.totalorder %s22, 1
      %p85 = por %p83, %p84
      %p87 = scmp.ne.s32.totalorder %s70, %s86
      %p88 = scmp.eq.s32.totalorder %s22, 0
      %p89 = por %p87, %p88
      %s91 = sadd.s32 %s90, 1
      %p94 = scmp.eq.s32.totalorder %s16, 1
      %p95 = scmp.ne.s32.totalorder %s90, %s92
      %p96 = scmp.eq.s32.totalorder %s16, 0
      %p97 = por %p95, %p96
      %p98 = scmp.ne.s32.totalorder %s90, %s92
      %p99 = scmp.eq.s32.totalorder %s21, 1
      %p100 = por %p98, %p99
      %p101 = scmp.ne.s32.totalorder %s92, %s93
      %p102 = scmp.eq.s32.totalorder %s21, 0
      %p103 = por %p101, %p102
      %p104 = scmp.ne.s32.totalorder %s92, %s93
      %p105 = scmp.eq.s32.totalorder %s22, 1
      %p106 = por %p104, %p105
      %p108 = scmp.ne.s32.totalorder %s93, %s107
      %p109 = scmp.eq.s32.totalorder %s22, 0
      %p110 = por %p108, %p109
      %s111 = ssub.s32 %s23, %s35
      %p112 = scmp.eq.s32.totalorder %s111, 0
      %s114 = sadd.s32 %s113, 1
      %s115 = scalar_select %p112, %s113, %s114
      %p118 = pneg %p112
      %p119 = scmp.eq.s32.totalorder %s16, 1
      %p120 = por %p118, %p119
      %p121 = scmp.ne.s32.totalorder %s113, %s116
      %p122 = scmp.eq.s32.totalorder %s16, 0
      %p123 = por %p121, %p122
      %p124 = scmp.ne.s32.totalorder %s113, %s116
      %p125 = scmp.eq.s32.totalorder %s21, 1
      %p126 = por %p124, %p125
      %p127 = scmp.ne.s32.totalorder %s116, %s117
      %p128 = scmp.eq.s32.totalorder %s21, 0
      %p129 = por %p127, %p128
      %p130 = scmp.ne.s32.totalorder %s116, %s117
      %p131 = scmp.eq.s32.totalorder %s22, 1
      %p132 = por %p130, %p131
      %p134 = scmp.ne.s32.totalorder %s117, %s133
      %p135 = scmp.eq.s32.totalorder %s22, 0
      %p136 = por %p134, %p135
      %p137 = scmp.le.s32.totalorder 1, %s16
      %p138 = scmp.lt.s32.totalorder %s16, 3
      %p139 = pnand %p137, %p138
      %p140 = pneg %p139
      // Predicated region
      $region9: #{tpu_custom_call.1} parent=5 // pred_check
        _
      $region10: #{tpu_custom_call.1} parent=5 // pred_check_branch
        %142 = sbr.rel (%p139) target = $region12
      $region11: #{tpu_custom_call.1} parent=5 // pred_region
        %s143 = ssub.s32 %s16, 1
        // Predicated region
        $region13: #{tpu_custom_call.1} parent=11 // pred_check
          %p144 = pneg %p103
        $region14: #{tpu_custom_call.1} parent=11 // pred_check_branch
          %146 = sbr.rel (%p144) target = $region16
        $region15: #{tpu_custom_call.1} parent=11 // pred_region
          _
        $region16: #{tpu_custom_call.1} parent=11 // pred_fallthru
          _
      $region12: #{tpu_custom_call.1} parent=5 // pred_fallthru
        _
      %p147 = scmp.lt.s32.totalorder %s16, 2
      // Predicated region
      $region17: #{tpu_custom_call.1} parent=5 // pred_check
        %p148 = pneg %p147
      $region18: #{tpu_custom_call.1} parent=5 // pred_check_branch
        %150 = sbr.rel (%p148) target = $region20
      $region19: #{tpu_custom_call.1} parent=5 // pred_region
        // Predicated region
        $region21: #{tpu_custom_call.1} parent=19 // pred_check
          %p151 = pneg %p50
        $region22: #{tpu_custom_call.1} parent=19 // pred_check_branch
          %153 = sbr.rel (%p151) target = $region24
        $region23: #{tpu_custom_call.1} parent=19 // pred_region
          %s154 = sand.u32 %s40, 1
          %s155 = scalar_lea.sflag [#allocation4], %s154
          %s156 = sand.u32 %s40, 1
          %s157 = smul.addr %s156, 64
          %s158 = scalar_lea.vmem [#allocation3], %s157
          %s159 = smul.u32 4, %s23
          %s160 = smul.u32 4, %s24
          %s162 = ssub.s32 1024, 1024
          %163 = vsyncadd %s155, %s162
          %s164 = smul.addr %s159, 8
          %s165 = sadd.s32 %s160, %s164
          %s166 = smul.addr %s165, 64
          %s167 = scalar_lea.hbm %s0, %s166
          %s168 = sshll.u32 %s158, 4
          %s169 = int_to_ptr.vmem [resolvable:$true] %s168
          %174 = dma.hbm_to_vmem [thread:$0]  %s167, 1024, %s169, %s155, 512, 256, 16
        $region24: #{tpu_custom_call.1} parent=19 // pred_fallthru
          _
        // Predicated region
        $region25: #{tpu_custom_call.1} parent=19 // pred_check
          %p175 = pneg %p76
        $region26: #{tpu_custom_call.1} parent=19 // pred_check_branch
          %177 = sbr.rel (%p175) target = $region28
        $region27: #{tpu_custom_call.1} parent=19 // pred_region
          %s178 = sand.u32 %s66, 1
          %s179 = scalar_lea.sflag [#allocation7], %s178
          %s180 = sand.u32 %s66, 1
          %s181 = smul.addr %s180, 256
          %s182 = scalar_lea.vmem [#allocation6], %s181
          %s183 = smul.u32 64, %s24
          %s185 = ssub.s32 4096, 4096
          %186 = vsyncadd %s179, %s185
          %s187 = smul.addr %s183, 64
          %s188 = scalar_lea.hbm %s1, %s187
          %s189 = sshll.u32 %s182, 4
          %s190 = int_to_ptr.vmem [resolvable:$true] %s189
          %195 = dma.hbm_to_vmem [thread:$0]  %s188, 4096, %s190, %s179, 64, 64, 4
        $region28: #{tpu_custom_call.1} parent=19 // pred_fallthru
          _
      $region20: #{tpu_custom_call.1} parent=5 // pred_fallthru
        _
      %p196 = scmp.le.s32.totalorder 1, %s16
      %p197 = scmp.lt.s32.totalorder %s16, 3
      %p198 = pnand %p196, %p197
      %p199 = pneg %p198
      // Predicated region
      $region29: #{tpu_custom_call.1} parent=5 // pred_check
        _
      $region30: #{tpu_custom_call.1} parent=5 // pred_check_branch
        %201 = sbr.rel (%p198) target = $region32
      $region31: #{tpu_custom_call.1} parent=5 // pred_region
        %s202 = ssub.s32 %s16, 1
        %s203 = sand.u32 %s43, 1
        %s204 = scalar_lea.sflag [#allocation4], %s203
        %s205 = sand.u32 %s43, 1
        %s206 = smul.addr %s205, 64
        %s207 = scalar_lea.vmem [#allocation3], %s206
        // Predicated region
        $region33: #{tpu_custom_call.1} parent=31 // pred_check
          %p208 = pneg %p56
        $region34: #{tpu_custom_call.1} parent=31 // pred_check_branch
          %210 = sbr.rel (%p208) target = $region36
        $region35: #{tpu_custom_call.1} parent=31 // pred_region
          %211 = dma.done %s204, 1024
        $region36: #{tpu_custom_call.1} parent=31 // pred_fallthru
          _
        %s212 = sand.u32 %s69, 1
        %s213 = scalar_lea.sflag [#allocation7], %s212
        %s214 = sand.u32 %s69, 1
        %s215 = smul.addr %s214, 256
        %s216 = scalar_lea.vmem [#allocation6], %s215
        // Predicated region
        $region37: #{tpu_custom_call.1} parent=31 // pred_check
          %p217 = pneg %p82
        $region38: #{tpu_custom_call.1} parent=31 // pred_check_branch
          %219 = sbr.rel (%p217) target = $region40
        $region39: #{tpu_custom_call.1} parent=31 // pred_region
          %220 = dma.done %s213, 4096
        $region40: #{tpu_custom_call.1} parent=31 // pred_fallthru
          _
        %s221 = sand.u32 %s43, 1
        %s222 = scalar_lea.sflag [#allocation4], %s221
        %s223 = sand.u32 %s43, 1
        %s224 = smul.addr %s223, 64
        %s225 = scalar_lea.vmem [#allocation3], %s224
        %p226 = pneg %p56
        %p227 = pneg %p53
        %s228 = sand.u32 %s69, 1
        %s229 = scalar_lea.sflag [#allocation7], %s228
        %s230 = sand.u32 %s69, 1
        %s231 = smul.addr %s230, 256
        %s232 = scalar_lea.vmem [#allocation6], %s231
        %p233 = pneg %p82
        %p234 = pneg %p79
        %p235 = pneg %p103
        %p236 = pneg %p100
        %p237 = pneg %p129
        %p238 = pneg %p126
        %s239 = smul.u32 4, %s25
        %s240 = smul.u32 4, %s26
        %s241 = smul.u32 64, %s26
        %s242 = smul.u32 4, %s25
        %p244 = scmp.eq.s32.totalorder %s26, 0
        // Predicated region
        $region41: #{tpu_custom_call.1} parent=31 // pred_check
          %p245 = pneg %p244
        $region42: #{tpu_custom_call.1} parent=31 // pred_check_branch
          %247 = sbr.rel (%p245) target = $region44
        $region43: #{tpu_custom_call.1} parent=31 // pred_region
          %248 = vst [vmem:[#allocation2] sm:$0xff] 0.0
          %249 = vst [vmem:[#allocation2 + $0x8] sm:$0xff] 0.0
          %250 = vst [vmem:[#allocation2 + $0x10] sm:$0xff] 0.0
          %251 = vst [vmem:[#allocation2 + $0x18] sm:$0xff] 0.0
        $region44: #{tpu_custom_call.1} parent=31 // pred_fallthru
          _
        %v252 = vld [vmem:[#allocation2] sm:$0xff]
        %v253 = vld [vmem:[#allocation2 + $0x8] sm:$0xff]
        %v254 = vld [vmem:[#allocation2 + $0x10] sm:$0xff]
        %v255 = vld [vmem:[#allocation2 + $0x18] sm:$0xff]
        %v256 = vld [vmem:[%s207] sm:$0xff]
        %v257 = vld [vmem:[%s207 + $0x8] sm:$0xff]
        %v258 = vld [vmem:[%s207 + $0x10] sm:$0xff]
        %v259 = vld [vmem:[%s207 + $0x18] sm:$0xff]
        %v260 = vld [vmem:[%s207 + $0x20] sm:$0xff]
        %v261 = vld [vmem:[%s207 + $0x28] sm:$0xff]
        %v262 = vld [vmem:[%s207 + $0x30] sm:$0xff]
        %v263 = vld [vmem:[%s207 + $0x38] sm:$0xff]
        %v264 = vld [vmem:[%s216] sm:$0xf]
        %v265 = vld [vmem:[%s216 + $0x4] sm:$0xf]
        %v266 = vld [vmem:[%s216 + $0x8] sm:$0xf]
        %v267 = vld [vmem:[%s216 + $0xc] sm:$0xf]
        %v268 = vld [vmem:[%s216 + $0x10] sm:$0xf]
        %v269 = vld [vmem:[%s216 + $0x14] sm:$0xf]
        %v270 = vld [vmem:[%s216 + $0x18] sm:$0xf]
        %v271 = vld [vmem:[%s216 + $0x1c] sm:$0xf]
        %v272 = vld [vmem:[%s216 + $0x20] sm:$0xf]
        %v273 = vld [vmem:[%s216 + $0x24] sm:$0xf]
        %v274 = vld [vmem:[%s216 + $0x28] sm:$0xf]
        %v275 = vld [vmem:[%s216 + $0x2c] sm:$0xf]
        %v276 = vld [vmem:[%s216 + $0x30] sm:$0xf]
        %v277 = vld [vmem:[%s216 + $0x34] sm:$0xf]
        %v278 = vld [vmem:[%s216 + $0x38] sm:$0xf]
        %v279 = vld [vmem:[%s216 + $0x3c] sm:$0xf]
        %v280 = vld [vmem:[%s216 + $0x40] sm:$0xf]
        %v281 = vld [vmem:[%s216 + $0x44] sm:$0xf]
        %v282 = vld [vmem:[%s216 + $0x48] sm:$0xf]
        %v283 = vld [vmem:[%s216 + $0x4c] sm:$0xf]
        %v284 = vld [vmem:[%s216 + $0x50] sm:$0xf]
        %v285 = vld [vmem:[%s216 + $0x54] sm:$0xf]
        %v286 = vld [vmem:[%s216 + $0x58] sm:$0xf]
        %v287 = vld [vmem:[%s216 + $0x5c] sm:$0xf]
        %v288 = vld [vmem:[%s216 + $0x60] sm:$0xf]
        %v289 = vld [vmem:[%s216 + $0x64] sm:$0xf]
        %v290 = vld [vmem:[%s216 + $0x68] sm:$0xf]
        %v291 = vld [vmem:[%s216 + $0x6c] sm:$0xf]
        %v292 = vld [vmem:[%s216 + $0x70] sm:$0xf]
        %v293 = vld [vmem:[%s216 + $0x74] sm:$0xf]
        %v294 = vld [vmem:[%s216 + $0x78] sm:$0xf]
        %v295 = vld [vmem:[%s216 + $0x7c] sm:$0xf]
        %v296 = vld [vmem:[%s216 + $0x80] sm:$0xf]
        %v297 = vld [vmem:[%s216 + $0x84] sm:$0xf]
        %v298 = vld [vmem:[%s216 + $0x88] sm:$0xf]
        %v299 = vld [vmem:[%s216 + $0x8c] sm:$0xf]
        %v300 = vld [vmem:[%s216 + $0x90] sm:$0xf]
        %v301 = vld [vmem:[%s216 + $0x94] sm:$0xf]
        %v302 = vld [vmem:[%s216 + $0x98] sm:$0xf]
        %v303 = vld [vmem:[%s216 + $0x9c] sm:$0xf]
        %v304 = vld [vmem:[%s216 + $0xa0] sm:$0xf]
        %v305 = vld [vmem:[%s216 + $0xa4] sm:$0xf]
        %v306 = vld [vmem:[%s216 + $0xa8] sm:$0xf]
        %v307 = vld [vmem:[%s216 + $0xac] sm:$0xf]
        %v308 = vld [vmem:[%s216 + $0xb0] sm:$0xf]
        %v309 = vld [vmem:[%s216 + $0xb4] sm:$0xf]
        %v310 = vld [vmem:[%s216 + $0xb8] sm:$0xf]
        %v311 = vld [vmem:[%s216 + $0xbc] sm:$0xf]
        %v312 = vld [vmem:[%s216 + $0xc0] sm:$0xf]
        %v313 = vld [vmem:[%s216 + $0xc4] sm:$0xf]
        %v314 = vld [vmem:[%s216 + $0xc8] sm:$0xf]
        %v315 = vld [vmem:[%s216 + $0xcc] sm:$0xf]
        %v316 = vld [vmem:[%s216 + $0xd0] sm:$0xf]
        %v317 = vld [vmem:[%s216 + $0xd4] sm:$0xf]
        %v318 = vld [vmem:[%s216 + $0xd8] sm:$0xf]
        %v319 = vld [vmem:[%s216 + $0xdc] sm:$0xf]
        %v320 = vld [vmem:[%s216 + $0xe0] sm:$0xf]
        %v321 = vld [vmem:[%s216 + $0xe4] sm:$0xf]
        %v322 = vld [vmem:[%s216 + $0xe8] sm:$0xf]
        %v323 = vld [vmem:[%s216 + $0xec] sm:$0xf]
        %v324 = vld [vmem:[%s216 + $0xf0] sm:$0xf]
        %v325 = vld [vmem:[%s216 + $0xf4] sm:$0xf]
        %v326 = vld [vmem:[%s216 + $0xf8] sm:$0xf]
        %v327 = vld [vmem:[%s216 + $0xfc] sm:$0xf]
        %v336 = vunpack.c.l.b16 %v256
        %v337 = vunpack.c.h.b16 %v256
        %v338 = vunpack.c.l.b16 %v257
        %v339 = vunpack.c.h.b16 %v257
        %v340 = vunpack.c.l.b16 %v258
        %v341 = vunpack.c.h.b16 %v258
        %v342 = vunpack.c.l.b16 %v259
        %v343 = vunpack.c.h.b16 %v259
        %v344 = vunpack.c.l.b16 %v260
        %v345 = vunpack.c.h.b16 %v260
        %v346 = vunpack.c.l.b16 %v261
        %v347 = vunpack.c.h.b16 %v261
        %v348 = vunpack.c.l.b16 %v262
        %v349 = vunpack.c.h.b16 %v262
        %v350 = vunpack.c.l.b16 %v263
        %v351 = vunpack.c.h.b16 %v263
        %v352 = vpack.c.b16 %v340, %v336
        %v353 = vpack.c.b16 %v341, %v337
        %v354 = vpack.c.b16 %v342, %v338
        %v355 = vpack.c.b16 %v343, %v339
        %v356 = vpack.c.b16 %v348, %v344
        %v357 = vpack.c.b16 %v349, %v345
        %v358 = vpack.c.b16 %v350, %v346
        %v359 = vpack.c.b16 %v351, %v347
        %v432 = vunpack.c.l.b16 %v264
        %v433 = vunpack.c.l.b16 %v265
        %v434 = vunpack.c.l.b16 %v266
        %v435 = vunpack.c.l.b16 %v267
        %v436 = vunpack.c.l.b16 %v268
        %v437 = vunpack.c.l.b16 %v269
        %v438 = vunpack.c.l.b16 %v270
        %v439 = vunpack.c.l.b16 %v271
        %v440 = vunpack.c.l.b16 %v272
        %v441 = vunpack.c.l.b16 %v273
        %v442 = vunpack.c.l.b16 %v274
        %v443 = vunpack.c.l.b16 %v275
        %v444 = vunpack.c.l.b16 %v276
        %v445 = vunpack.c.l.b16 %v277
        %v446 = vunpack.c.l.b16 %v278
        %v447 = vunpack.c.l.b16 %v279
        %v448 = vunpack.c.l.b16 %v280
        %v449 = vunpack.c.l.b16 %v281
        %v450 = vunpack.c.l.b16 %v282
        %v451 = vunpack.c.l.b16 %v283
        %v452 = vunpack.c.l.b16 %v284
        %v453 = vunpack.c.l.b16 %v285
        %v454 = vunpack.c.l.b16 %v286
        %v455 = vunpack.c.l.b16 %v287
        %v456 = vunpack.c.l.b16 %v288
        %v457 = vunpack.c.l.b16 %v289
        %v458 = vunpack.c.l.b16 %v290
        %v459 = vunpack.c.l.b16 %v291
        %v460 = vunpack.c.l.b16 %v292
        %v461 = vunpack.c.l.b16 %v293
        %v462 = vunpack.c.l.b16 %v294
        %v463 = vunpack.c.l.b16 %v295
        %v464 = vunpack.c.l.b16 %v296
        %v465 = vunpack.c.l.b16 %v297
        %v466 = vunpack.c.l.b16 %v298
        %v467 = vunpack.c.l.b16 %v299
        %v468 = vunpack.c.l.b16 %v300
        %v469 = vunpack.c.l.b16 %v301
        %v470 = vunpack.c.l.b16 %v302
        %v471 = vunpack.c.l.b16 %v303
        %v472 = vunpack.c.l.b16 %v304
        %v473 = vunpack.c.l.b16 %v305
        %v474 = vunpack.c.l.b16 %v306
        %v475 = vunpack.c.l.b16 %v307
        %v476 = vunpack.c.l.b16 %v308
        %v477 = vunpack.c.l.b16 %v309
        %v478 = vunpack.c.l.b16 %v310
        %v479 = vunpack.c.l.b16 %v311
        %v480 = vunpack.c.l.b16 %v312
        %v481 = vunpack.c.l.b16 %v313
        %v482 = vunpack.c.l.b16 %v314
        %v483 = vunpack.c.l.b16 %v315
        %v484 = vunpack.c.l.b16 %v316
        %v485 = vunpack.c.l.b16 %v317
        %v486 = vunpack.c.l.b16 %v318
        %v487 = vunpack.c.l.b16 %v319
        %v488 = vunpack.c.l.b16 %v320
        %v489 = vunpack.c.l.b16 %v321
        %v490 = vunpack.c.l.b16 %v322
        %v491 = vunpack.c.l.b16 %v323
        %v492 = vunpack.c.l.b16 %v324
        %v493 = vunpack.c.l.b16 %v325
        %v494 = vunpack.c.l.b16 %v326
        %v495 = vunpack.c.l.b16 %v327
        %v496 = vpack.c.b16 %v433, %v432
        %v497 = vpack.c.b16 %v435, %v434
        %v498 = vpack.c.b16 %v437, %v436
        %v499 = vpack.c.b16 %v439, %v438
        %v500 = vpack.c.b16 %v441, %v440
        %v501 = vpack.c.b16 %v443, %v442
        %v502 = vpack.c.b16 %v445, %v444
        %v503 = vpack.c.b16 %v447, %v446
        %v504 = vpack.c.b16 %v449, %v448
        %v505 = vpack.c.b16 %v451, %v450
        %v506 = vpack.c.b16 %v453, %v452
        %v507 = vpack.c.b16 %v455, %v454
        %v508 = vpack.c.b16 %v457, %v456
        %v509 = vpack.c.b16 %v459, %v458
        %v510 = vpack.c.b16 %v461, %v460
        %v511 = vpack.c.b16 %v463, %v462
        %v512 = vpack.c.b16 %v465, %v464
        %v513 = vpack.c.b16 %v467, %v466
        %v514 = vpack.c.b16 %v469, %v468
        %v515 = vpack.c.b16 %v471, %v470
        %v516 = vpack.c.b16 %v473, %v472
        %v517 = vpack.c.b16 %v475, %v474
        %v518 = vpack.c.b16 %v477, %v476
        %v519 = vpack.c.b16 %v479, %v478
        %v520 = vpack.c.b16 %v481, %v480
        %v521 = vpack.c.b16 %v483, %v482
        %v522 = vpack.c.b16 %v485, %v484
        %v523 = vpack.c.b16 %v487, %v486
        %v524 = vpack.c.b16 %v489, %v488
        %v525 = vpack.c.b16 %v491, %v490
        %v526 = vpack.c.b16 %v493, %v492
        %v527 = vpack.c.b16 %v495, %v494
        %560 = vmatprep.subr.bf16.mxu0 0
        %561 = vmatpush1.bf16.msra.mxu0 %v503
        %562 = vmatprep.subr.bf16.mxu0 0
        %563 = vmatpush1.bf16.msra.mxu0 %v502
        %564 = vmatprep.subr.bf16.mxu0 0
        %565 = vmatpush1.bf16.msra.mxu0 %v501
        %566 = vmatprep.subr.bf16.mxu0 0
        %567 = vmatpush1.bf16.msra.mxu0 %v500
        %568 = vmatprep.subr.bf16.mxu0 0
        %569 = vmatpush1.bf16.msra.mxu0 %v499
        %570 = vmatprep.subr.bf16.mxu0 0
        %571 = vmatpush1.bf16.msra.mxu0 %v498
        %572 = vmatprep.subr.bf16.mxu0 0
        %573 = vmatpush1.bf16.msra.mxu0 %v497
        %574 = vmatprep.subr.bf16.mxu0 0
        %575 = vmatpush1.bf16.msra.mxu0 %v496
        %576 = vmatprep.subr.bf16.mxu0 0
        %577 = vmatpush2.bf16.msra.mxu0 %v511
        %578 = vmatprep.subr.bf16.mxu0 0
        %579 = vmatpush2.bf16.msra.mxu0 %v510
        %580 = vmatprep.subr.bf16.mxu0 0
        %581 = vmatpush2.bf16.msra.mxu0 %v509
        %582 = vmatprep.subr.bf16.mxu0 0
        %583 = vmatpush2.bf16.msra.mxu0 %v508
        %584 = vmatprep.subr.bf16.mxu0 0
        %585 = vmatpush2.bf16.msra.mxu0 %v507
        %586 = vmatprep.subr.bf16.mxu0 0
        %587 = vmatpush2.bf16.msra.mxu0 %v506
        %588 = vmatprep.subr.bf16.mxu0 0
        %589 = vmatpush2.bf16.msra.mxu0 %v505
        %590 = vmatprep.subr.bf16.mxu0 0
        %591 = vmatpush2.bf16.msra.mxu0 %v504
        %592 = vmatprep.mubr.bf16.mxu0 %v353
        %593 = vmatmul.mubr.bf16.gmra.mxu0 %v352
        %v594 = vpop.f32.mrf.mxu0
        %v595 = vadd.f32 0.0, %v594
        %v596 = vpop.f32.mrf.mxu0
        %v597 = vpop.f32.mrf.mxu0
        %v598 = vadd.f32 0.0, %v597
        %v599 = vpop.f32.mrf.mxu0
        %600 = vmatprep.mubr.bf16.mxu0 %v357
        %601 = vmatmul.mubr.bf16.gmra.mxu0 %v356
        %v602 = vpop.f32.mrf.mxu0
        %v603 = vadd.f32 0.0, %v602
        %v604 = vpop.f32.mrf.mxu0
        %v605 = vpop.f32.mrf.mxu0
        %v606 = vadd.f32 0.0, %v605
        %v607 = vpop.f32.mrf.mxu0
        %608 = vdwg.mxu0
        %609 = vmatprep.subr.bf16.mxu0 0
        %610 = vmatpush1.bf16.msra.mxu0 %v519
        %611 = vmatprep.subr.bf16.mxu0 0
        %612 = vmatpush1.bf16.msra.mxu0 %v518
        %613 = vmatprep.subr.bf16.mxu0 0
        %614 = vmatpush1.bf16.msra.mxu0 %v517
        %615 = vmatprep.subr.bf16.mxu0 0
        %616 = vmatpush1.bf16.msra.mxu0 %v516
        %617 = vmatprep.subr.bf16.mxu0 0
        %618 = vmatpush1.bf16.msra.mxu0 %v515
        %619 = vmatprep.subr.bf16.mxu0 0
        %620 = vmatpush1.bf16.msra.mxu0 %v514
        %621 = vmatprep.subr.bf16.mxu0 0
        %622 = vmatpush1.bf16.msra.mxu0 %v513
        %623 = vmatprep.subr.bf16.mxu0 0
        %624 = vmatpush1.bf16.msra.mxu0 %v512
        %625 = vmatprep.subr.bf16.mxu0 0
        %626 = vmatpush2.bf16.msra.mxu0 %v527
        %627 = vmatprep.subr.bf16.mxu0 0
        %628 = vmatpush2.bf16.msra.mxu0 %v526
        %629 = vmatprep.subr.bf16.mxu0 0
        %630 = vmatpush2.bf16.msra.mxu0 %v525
        %631 = vmatprep.subr.bf16.mxu0 0
        %632 = vmatpush2.bf16.msra.mxu0 %v524
        %633 = vmatprep.subr.bf16.mxu0 0
        %634 = vmatpush2.bf16.msra.mxu0 %v523
        %635 = vmatprep.subr.bf16.mxu0 0
        %636 = vmatpush2.bf16.msra.mxu0 %v522
        %637 = vmatprep.subr.bf16.mxu0 0
        %638 = vmatpush2.bf16.msra.mxu0 %v521
        %639 = vmatprep.subr.bf16.mxu0 0
        %640 = vmatpush2.bf16.msra.mxu0 %v520
        %641 = vmatprep.mubr.bf16.mxu0 %v355
        %642 = vmatmul.mubr.bf16.gmra.mxu0 %v354
        %v643 = vpop.f32.mrf.mxu0
        %v644 = vadd.f32 %v595, %v643
        %v645 = vpop.f32.mrf.mxu0
        %v646 = vpop.f32.mrf.mxu0
        %v647 = vadd.f32 %v598, %v646
        %v648 = vpop.f32.mrf.mxu0
        %649 = vmatprep.mubr.bf16.mxu0 %v359
        %650 = vmatmul.mubr.bf16.gmra.mxu0 %v358
        %v651 = vpop.f32.mrf.mxu0
        %v652 = vadd.f32 %v603, %v651
        %v653 = vpop.f32.mrf.mxu0
        %v654 = vpop.f32.mrf.mxu0
        %v655 = vadd.f32 %v606, %v654
        %v656 = vpop.f32.mrf.mxu0
        %657 = vdwg.mxu0
        %v658 = vadd.f32 %v252, %v644
        %v659 = vadd.f32 %v253, %v647
        %v660 = vadd.f32 %v254, %v652
        %v661 = vadd.f32 %v255, %v655
        %662 = vst [vmem:[#allocation2] sm:$0xff] %v658
        %663 = vst [vmem:[#allocation2 + $0x8] sm:$0xff] %v659
        %664 = vst [vmem:[#allocation2 + $0x10] sm:$0xff] %v660
        %665 = vst [vmem:[#allocation2 + $0x18] sm:$0xff] %v661
        %p666 = scmp.eq.s32.totalorder %s26, 1
        // Predicated region
        $region45: #{tpu_custom_call.1} parent=31 // pred_check
          %p667 = pneg %p666
        $region46: #{tpu_custom_call.1} parent=31 // pred_check_branch
          %669 = sbr.rel (%p667) target = $region48
        $region47: #{tpu_custom_call.1} parent=31 // pred_region
          %v670 = vld [vmem:[#allocation2] sm:$0xff]
          %v671 = vld [vmem:[#allocation2 + $0x8] sm:$0xff]
          %v672 = vld [vmem:[#allocation2 + $0x10] sm:$0xff]
          %v673 = vld [vmem:[#allocation2 + $0x18] sm:$0xff]
          %v674 = vld [vmem:[%s2] sm:$0x1]
          %v676 = vlaneseq
          %v677 = vshrl.u32 %v676, 7
          %v678 = vsub.s32 0, %v677
          %v679 = vrot.slane %v674, %v678
          %v681 = vadd.f32 %v670, %v679
          %v682 = vadd.f32 %v671, %v679
          %v683 = vadd.f32 %v672, %v679
          %v684 = vadd.f32 %v673, %v679
          %v685 = vmax.f32 %v681, 0.0
          %v686 = vmax.f32 %v682, 0.0
          %v687 = vmax.f32 %v683, 0.0
          %v688 = vmax.f32 %v684, 0.0
          %689 = vst [vmem:[#allocation8] sm:$0xff] %v685
          %690 = vst [vmem:[#allocation8 + $0x8] sm:$0xff] %v686
          %691 = vst [vmem:[#allocation8 + $0x10] sm:$0xff] %v687
          %692 = vst [vmem:[#allocation8 + $0x18] sm:$0xff] %v688
        $region48: #{tpu_custom_call.1} parent=31 // pred_fallthru
          _
        // Predicated region
        $region49: #{tpu_custom_call.1} parent=31 // pred_check
          %p693 = pneg %p126
        $region50: #{tpu_custom_call.1} parent=31 // pred_check_branch
          %695 = sbr.rel (%p693) target = $region52
        $region51: #{tpu_custom_call.1} parent=31 // pred_region
          %s696 = smul.u32 4, %s25
          %s698 = ssub.s32 512, 512
          %699 = vsyncadd [#allocation5], %s698
          %s700 = smul.addr %s696, 128
          %s701 = scalar_lea.hbm %s3, %s700
          %s702 = sshll.u32 [#allocation8], 4
          %s703 = int_to_ptr.vmem [resolvable:$true] %s702
          %708 = dma.vmem_to_hbm [thread:$0]  %s703, 512, %s701, [#allocation5], 128, 128, 8
        $region52: #{tpu_custom_call.1} parent=31 // pred_fallthru
          _
        // Predicated region
        $region53: #{tpu_custom_call.1} parent=31 // pred_check
          %p709 = pneg %p126
        $region54: #{tpu_custom_call.1} parent=31 // pred_check_branch
          %711 = sbr.rel (%p709) target = $region56
        $region55: #{tpu_custom_call.1} parent=31 // pred_region
          %712 = dma.done [#allocation5], 512
        $region56: #{tpu_custom_call.1} parent=31 // pred_fallthru
          _
      $region32: #{tpu_custom_call.1} parent=5 // pred_fallthru
        _
      %p713 = scmp.le.s32.totalorder 2, %s16
      // Predicated region
      $region57: #{tpu_custom_call.1} parent=5 // pred_check
        %p714 = pneg %p713
      $region58: #{tpu_custom_call.1} parent=5 // pred_check_branch
        %716 = sbr.rel (%p714) target = $region60
      $region59: #{tpu_custom_call.1} parent=5 // pred_region
        %s717 = ssub.s32 %s16, 2
      $region60: #{tpu_custom_call.1} parent=5 // pred_fallthru
        _
    $region6: #{tpu_custom_call.1} parent=1 // loop_footer
      %s20 = sadd.s32 1, %s16
    $region7: #{tpu_custom_call.1} parent=1 // loop_footer_branch
      %15 = sbr.rel target = $region3
    $region8: #{tpu_custom_call.1} parent=1 // loop_exit
      _
    %718 = vsyncpa [#allocation4], 1
    %s719 = scalar_lea.sflag [#allocation4], 1
    %720 = vsyncpa %s719, 1
    %721 = vsyncpa [#allocation7], 1
    %s722 = scalar_lea.sflag [#allocation7], 1
    %723 = vsyncpa %s722, 1
    %724 = vsyncpa [#allocation5], 1
    %s725 = scalar_lea.sflag [#allocation5], 1
    %726 = vsyncpa %s725, 1

</llo_original>
